<compile_context>
chip_gen: v5e
topology: v5e:2x2
jax: 0.10.0
libtpu: 0.0.40
codegen_flags: <defaults>
</compile_context>

<pallas_src>
import functools

import jax
import jax.numpy as jnp
from jax.experimental import pallas as pl
from jax.experimental.pallas import tpu as pltpu


DEFAULT_TM = 512
DEFAULT_TN = 512
DEFAULT_TK = 1024


def _round_up(x, m):
    return ((x + m - 1) // m) * m


def _plan_k(K, tk=DEFAULT_TK):
    """Reduction-axis plan: (tk, Kp). Single full-K step when it fits, else
    128-aligned K tiles with explicit zero padding to Kp."""
    if K <= tk:
        return K, K                       # block == full K dim -> legal, no padding
    tk = max(128, (tk // 128) * 128)
    return tk, _round_up(K, tk)


def prepare_weight(weight, *, compute_dtype=jnp.bfloat16, tk=DEFAULT_TK):
    """(N, K) PyTorch-layout weight -> cached lane-dense (Kp, N) compute weight.

    Done once at parameter-construction time so the forward pass pays no
    per-call transpose / pad / cast HBM traffic.
    """
    N, K = weight.shape
    _, Kp = _plan_k(K, tk)
    w_kn = weight.T.astype(compute_dtype)
    if Kp != K:
        w_kn = jnp.pad(w_kn, ((0, Kp - K), (0, 0)))   # zero-pad K only (correctness)
    return w_kn


def prepare_bias(bias, b_mul):
    """bias -> (1, N) float32 bias pre-scaled by b_mul (added to the f32 accumulator)."""
    if bias is None:
        return None
    return (bias.astype(jnp.float32) * jnp.float32(b_mul)).reshape(1, -1)


# ----------------------------- kernels -------------------------------------


def _eq_linear_kernel_single_k(wmul_ref, *refs, use_bias, compute_dtype):
    # grid = (M tiles, N tiles); whole reduction in one MXU call, no scratch.
    if use_bias:
        x_ref, w_ref, b_ref, o_ref = refs
    else:
        x_ref, w_ref, o_ref = refs
        b_ref = None

    out = jnp.dot(x_ref[...].astype(compute_dtype), w_ref[...],
                  preferred_element_type=jnp.float32)
    out = out * wmul_ref[0]               # scale the (tm, tn) tile once
    if use_bias:
        out = out + b_ref[...]            # bias already pre-scaled by b_mul (f32)
    o_ref[...] = out.astype(o_ref.dtype)


def _eq_linear_kernel_multi_k(wmul_ref, *refs, use_bias, compute_dtype):
    # grid = (M tiles, N tiles, K tiles); K is the reduction axis ("arbitrary").
    if use_bias:
        x_ref, w_ref, b_ref, o_ref, acc_ref = refs
    else:
        x_ref, w_ref, o_ref, acc_ref = refs
        b_ref = None

    k = pl.program_id(2)
    partial = jnp.dot(x_ref[...].astype(compute_dtype), w_ref[...],
                      preferred_element_type=jnp.float32)

    @pl.when(k == 0)
    def _():
        acc_ref[...] = partial            # overwrite on first step (no zero-init pass)

    @pl.when(k > 0)
    def _():
        acc_ref[...] += partial

    @pl.when(k == pl.num_programs(2) - 1)
    def _():
        out = acc_ref[...] * wmul_ref[0]
        if use_bias:
            out = out + b_ref[...]
        o_ref[...] = out.astype(o_ref.dtype)


# ----------------------------- forward wrapper ------------------------------


def equalized_linear_fwd(x, w_kn, bias_scaled, w_mul, *,
                         tm=DEFAULT_TM, tn=DEFAULT_TN, tk=DEFAULT_TK,
                         compute_dtype=jnp.bfloat16):
    """y = x @ (W * w_mul).T + bias*b_mul, with W cached as w_kn = (Kp, N)."""
    orig_shape = x.shape
    if x.ndim != 2:
        x = x.reshape(-1, orig_shape[-1])
    B, K = x.shape
    Kp, N = w_kn.shape
    use_bias = bias_scaled is not None

    tk, Kp_expect = _plan_k(K, tk)
    assert Kp == Kp_expect, "w_kn was prepared with a different tk than the forward call"

    if Kp != K:
        x = jnp.pad(x, ((0, 0), (0, Kp - K)))      # zero-pad K only

    # --- tile planning: (8,128)-legal, no B/N padding (partial edge blocks are masked)
    tm = min(max(8, (tm // 8) * 8), _round_up(B, 8))
    if N <= tn:
        tn = N                                     # single full-width tile (full-dim block)
    else:
        tn = max(128, (tn // 128) * 128)           # lane-aligned tile, partial edge masked

    # v7x has 2 TensorCores: if there is only one M tile, split N so both get work.
    if pl.cdiv(B, tm) == 1 and N >= 256 and pl.cdiv(N, tn) < 2:
        tn = _round_up(pl.cdiv(N, 2), 128)

    grid_m = pl.cdiv(B, tm)
    grid_n = pl.cdiv(N, tn)
    grid_k = Kp // tk
    single_k = grid_k == 1

    w_mul_arr = jnp.asarray([w_mul], dtype=jnp.float32)   # SMEM scalar prefetch

    if single_k:
        grid = (grid_m, grid_n)
        in_specs = [
            pl.BlockSpec((tm, tk), lambda i, j, wm: (i, 0)),   # x tile
            pl.BlockSpec((tk, tn), lambda i, j, wm: (0, j)),   # W (K,N) tile
        ]
        if use_bias:
            in_specs.append(pl.BlockSpec((1, tn), lambda i, j, wm: (0, j)))
        out_spec = pl.BlockSpec((tm, tn), lambda i, j, wm: (i, j))
        scratch = []
        kernel = functools.partial(_eq_linear_kernel_single_k,
                                   use_bias=use_bias, compute_dtype=compute_dtype)
        dims = ("parallel", "parallel")
    else:
        grid = (grid_m, grid_n, grid_k)
        in_specs = [
            pl.BlockSpec((tm, tk), lambda i, j, k, wm: (i, k)),
            pl.BlockSpec((tk, tn), lambda i, j, k, wm: (k, j)),
        ]
        if use_bias:
            in_specs.append(pl.BlockSpec((1, tn), lambda i, j, k, wm: (0, j)))
        out_spec = pl.BlockSpec((tm, tn), lambda i, j, k, wm: (i, j))
        scratch = [pltpu.VMEM((tm, tn), jnp.float32)]
        kernel = functools.partial(_eq_linear_kernel_multi_k,
                                   use_bias=use_bias, compute_dtype=compute_dtype)
        dims = ("parallel", "parallel", "arbitrary")

    operands = [w_mul_arr, x, w_kn]
    if use_bias:
        operands.append(bias_scaled)

    # VMEM budget from the actual tile plan (double-buffered in/out) + headroom,
    # capped at 40 MiB so it stays safe on v7x's 64 MiB physical VMEM.
    isz = lambda a: jnp.dtype(a.dtype).itemsize
    tile_bytes = 2 * (tm * tk * isz(x) + tk * tn * isz(w_kn) + tm * tn * isz(x))
    if use_bias:
        tile_bytes += 2 * tn * 4
    if not single_k:
        tile_bytes += tm * tn * 4
    vmem_limit = int(min(max(2 * tile_bytes, 16 << 20), 40 << 20))

    out = pl.pallas_call(
        kernel,
        out_shape=jax.ShapeDtypeStruct((B, N), x.dtype),
        grid_spec=pltpu.PrefetchScalarGridSpec(
            num_scalar_prefetch=1,
            grid=grid,
            in_specs=in_specs,
            out_specs=out_spec,
            scratch_shapes=scratch,
        ),
        compiler_params=pltpu.CompilerParams(
            dimension_semantics=dims,
            vmem_limit_bytes=vmem_limit,
        ),
    )(*operands)

    if len(orig_shape) != 2:
        out = out.reshape(orig_shape[:-1] + (N,))
    return out


def equalized_linear(x, weight, bias, *, w_mul, b_mul=1.0,
                     tm=DEFAULT_TM, tn=DEFAULT_TN, tk=DEFAULT_TK,
                     compute_dtype=jnp.bfloat16):
    """One-shot API matching the PyTorch layout (weight: (N, K), bias: (N,) or None).
    For repeated calls, cache prepare_weight / prepare_bias (see EqualizedLinearParams)."""
    w_kn = prepare_weight(weight, compute_dtype=compute_dtype, tk=tk)
    b2d = prepare_bias(bias, b_mul)
    return equalized_linear_fwd(x, w_kn, b2d, float(w_mul),
                                tm=tm, tn=tn, tk=tk, compute_dtype=compute_dtype)


class EqualizedLinearParams:
    """Mirrors the PyTorch EqualizedLinear __init__/forward.

    The weight is kept in the reference (N, K) f32 layout and additionally
    cached as a pre-transposed / K-padded / bf16 (Kp, N) compute copy so the
    forward pass pays no per-call layout or cast traffic.
    """

    def __init__(self, key, input_size, output_size, gain=2 ** 0.5,
                 use_wscale=False, lrmul=1.0, bias=True, dtype=jnp.float32,
                 compute_dtype=jnp.bfloat16,
                 tm=DEFAULT_TM, tn=DEFAULT_TN, tk=DEFAULT_TK):
        he_std = gain * input_size ** (-0.5)
        if use_wscale:
            init_std = 1.0 / lrmul
            self.w_mul = he_std * lrmul
        else:
            init_std = he_std / lrmul
            self.w_mul = lrmul
        self.weight = (jax.random.normal(key, (output_size, input_size), dtype=dtype)
                       * jnp.asarray(init_std, dtype))
        if bias:
            self.bias = jnp.zeros((output_size,), dtype=dtype)
            self.b_mul = lrmul
        else:
            self.bias = None
            self.b_mul = None
        self.tm, self.tn, self.tk = tm, tn, tk
        self.compute_dtype = compute_dtype
        # Cached compute-layout parameters (prepared once, reused every forward).
        self.w_kn = prepare_weight(self.weight, compute_dtype=compute_dtype, tk=tk)
        self.bias_scaled = prepare_bias(self.bias, self.b_mul) if bias else None

    def __call__(self, x):
        return equalized_linear_fwd(
            x, self.w_kn, self.bias_scaled, float(self.w_mul),
            tm=self.tm, tn=self.tn, tk=self.tk,
            compute_dtype=self.compute_dtype)


if __name__ == "__main__":
    key = jax.random.PRNGKey(0)
    k_w, k_x, k_w2, k_x2 = jax.random.split(key, 4)

    # Small shapes consistent with the mapping-network usage.
    batch, in_features, out_features = 8, 32, 64
    layer = EqualizedLinearParams(k_w, in_features, out_features,
                                  gain=2 ** 0.5, use_wscale=True,
                                  lrmul=0.5, bias=True)
    x = jax.random.normal(k_x, (batch, in_features), dtype=jnp.float32)

    y = jax.block_until_ready(layer(x))
    ref = x @ (layer.weight * layer.w_mul).T + layer.bias * layer.b_mul
    assert y.shape == (batch, out_features)
    # bf16 MXU feed (f32 accumulation) -> slightly looser tolerance vs the pure-f32 reference.
    assert jnp.allclose(y, ref, atol=5e-2, rtol=5e-2), float(jnp.max(jnp.abs(y - ref)))

    # bias=None path.
    layer_nb = EqualizedLinearParams(k_w, in_features, out_features,
                                     gain=2 ** 0.5, use_wscale=False,
                                     lrmul=1.0, bias=False)
    y_nb = jax.block_until_ready(layer_nb(x))
    ref_nb = x @ (layer_nb.weight * layer_nb.w_mul).T
    assert jnp.allclose(y_nb, ref_nb, atol=5e-2, rtol=5e-2)

    # Multi-K-step (VMEM accumulator) path: force tk < K.
    b2, k2, n2 = 16, 256, 128
    w2 = jax.random.normal(k_w2, (n2, k2), dtype=jnp.float32) * 0.05
    x2 = jax.random.normal(k_x2, (b2, k2), dtype=jnp.float32)
    y2 = jax.block_until_ready(equalized_linear(x2, w2, None, w_mul=0.25, tk=128))
    ref2 = x2 @ (w2 * 0.25).T
    assert jnp.allclose(y2, ref2, atol=5e-2, rtol=5e-2)

    print("KERNEL_OK")
</pallas_src>

<mosaic_0001>
module attributes {stable_mosaic.version = 11 : i64} {
  func.func @_eq_linear_kernel_single_k(%arg0: i32, %arg1: i32, %arg2: memref<1xf32, #tpu.memory_space<smem>>, %arg3: memref<8x32xf32, #tpu.memory_space<vmem>>, %arg4: memref<32x64xbf16, #tpu.memory_space<vmem>>, %arg5: memref<1x64xf32, #tpu.memory_space<vmem>>, %arg6: memref<8x64xf32, #tpu.memory_space<vmem>>) attributes {dimension_semantics = [#tpu.dimension_semantics<parallel>, #tpu.dimension_semantics<parallel>], iteration_bounds = array<i64: 1, 1>, scalar_prefetch = 1 : i64, scratch_operands = 0 : i64, tpu.core_type = #tpu.core_type<tc>, window_params = [{transform_indices = @transform_0, window_bounds = array<i64: 8, 32>}, {transform_indices = @transform_1, window_bounds = array<i64: 32, 64>}, {transform_indices = @transform_2, window_bounds = array<i64: 1, 64>}, {transform_indices = @transform_3, window_bounds = array<i64: 8, 64>}]} {
    %c0 = arith.constant 0 : index
    %c0_0 = arith.constant 0 : index
    %0 = vector.load %arg3[%c0, %c0_0] : memref<8x32xf32, #tpu.memory_space<vmem>>, vector<8x32xf32>
    %1 = arith.truncf %0 : vector<8x32xf32> to vector<8x32xbf16>
    %c0_1 = arith.constant 0 : index
    %c0_2 = arith.constant 0 : index
    %2 = vector.load %arg4[%c0_1, %c0_2] : memref<32x64xbf16, #tpu.memory_space<vmem>>, vector<32x64xbf16>
    %cst = arith.constant dense<0.000000e+00> : vector<8x64xf32>
    %3 = tpu.matmul %1, %2, %cst {dimension_numbers = #tpu.dot_dimension_numbers<[1], [0], [0], [1], [0, 0, 1, 1], [], []>} : vector<8x32xbf16>, vector<32x64xbf16>, vector<8x64xf32> -> vector<8x64xf32>
    %c0_3 = arith.constant 0 : index
    %4 = memref.load %arg2[%c0_3] : memref<1xf32, #tpu.memory_space<smem>>
    %5 = vector.broadcast %4 : f32 to vector<8x64xf32>
    %6 = arith.mulf %3, %5 : vector<8x64xf32>
    %c0_4 = arith.constant 0 : index
    %c0_5 = arith.constant 0 : index
    %7 = vector.load %arg5[%c0_4, %c0_5] : memref<1x64xf32, #tpu.memory_space<vmem>>, vector<1x64xf32>
    %8 = vector.broadcast %7 : vector<1x64xf32> to vector<8x64xf32>
    %9 = arith.addf %6, %8 : vector<8x64xf32>
    %c0_6 = arith.constant 0 : index
    %c0_7 = arith.constant 0 : index
    %10 = vector.load %arg6[%c0_6, %c0_7] : memref<8x64xf32, #tpu.memory_space<vmem>>, vector<8x64xf32>
    tpu.vector_store %arg6[%c0_6, %c0_7], %9 {strides = array<i32>} : memref<8x64xf32, #tpu.memory_space<vmem>>, vector<8x64xf32>,
    return
  }
  func.func @transform_0(%arg0: i32, %arg1: i32, %arg2: memref<1xf32, #tpu.memory_space<smem>>) -> (i32, i32) {
    %c0_i32 = arith.constant 0 : i32
    %c0_i32_0 = arith.constant 0 : i32
    return %arg0, %c0_i32 : i32, i32
  }
  func.func @transform_1(%arg0: i32, %arg1: i32, %arg2: memref<1xf32, #tpu.memory_space<smem>>) -> (i32, i32) {
    %c0_i32 = arith.constant 0 : i32
    %c0_i32_0 = arith.constant 0 : i32
    return %c0_i32, %arg1 : i32, i32
  }
  func.func @transform_2(%arg0: i32, %arg1: i32, %arg2: memref<1xf32, #tpu.memory_space<smem>>) -> (i32, i32) {
    %c0_i32 = arith.constant 0 : i32
    %c0_i32_0 = arith.constant 0 : i32
    return %c0_i32, %arg1 : i32, i32
  }
  func.func @transform_3(%arg0: i32, %arg1: i32, %arg2: memref<1xf32, #tpu.memory_space<smem>>) -> (i32, i32) {
    %c0_i32 = arith.constant 0 : i32
    return %arg0, %arg1 : i32, i32
  }
}

</mosaic_0001>

<llo_original>
// kernel: tpu_custom_call.1
$region0: #{tpu_custom_call.1}
  #allocation0 [shape = 'u32[]', space=smem, size = 0x4, offset = 0x4, fixed_abs, tag = 'smem constant byte address 0x4 - core index']
  #allocation1 [shape = 'u32[72,128]{1,0:T(1,128)}', space=vmem, size = 0x9000, scoped, tag = 'internal scratch']
  #allocation2 [shape = 's32[1]{0}', space=sflag, size = 0x4, scoped, tag = 'scoped memory for tpu_custom_call.1']
  #allocation3 [shape = 'f32[1]{0:T(128)S(6)}', space=smem, size = 0x200, scoped, tag = 'prefetched SMEM operand 0']
  %s0 = inlined_call_operand.<no memory space> [shape: f32[1], index: 0, kind: input, shape index: {}]
  %s1 = inlined_call_operand.hbm [shape: f32[8,32], index: 1, kind: input, shape index: {}]
  %s2 = inlined_call_operand.hbm [shape: bf16[32,64], index: 2, kind: input, shape index: {}]
  %s3 = inlined_call_operand.vmem [shape: f32[1,64], index: 3, kind: input, shape index: {}]
  %s4 = inlined_call_operand.hbm [shape: f32[8,64], index: 4, kind: output, shape index: {}]
  %s5 = sld [smem:[#allocation0]]
  $region30: #{tpu_custom_call.1} parent=0
    _
  %s7 = ssub.s32 1, %s5
  %s8 = scalar_select 0, %s7, %s5
  %9 = sst [smem:[#allocation3]] %s0
  $region1: #{tpu_custom_call.1} parent=0
    #allocation4 [shape = 'u8[4096]{0}', space=vmem, size = 0x1000, scoped, tag = 'input window, operand 1, single buffered']
    #allocation5 [shape = 's32[1]{0}', space=sflag, size = 0x4, scoped, tag = 'scoped memory for tpu_custom_call.1']
    #allocation6 [shape = 's32[1]{0}', space=sflag, size = 0x4, scoped, tag = 'scoped memory for tpu_custom_call.1']
    #allocation7 [shape = 'u8[8192]{0}', space=vmem, size = 0x2000, scoped, tag = 'input window, operand 2, single buffered']
    #allocation8 [shape = 's32[1]{0}', space=sflag, size = 0x4, scoped, tag = 'scoped memory for tpu_custom_call.1']
    #allocation9 [shape = 'u8[4096]{0}', space=vmem, size = 0x1000, scoped, tag = 'output window, operand 0, single buffered']
    %10 = vsyncpa [#allocation5], 0
    %11 = vsyncpa [#allocation8], 0
    %12 = vsyncpa [#allocation6], 0
    // Predicated region
    $region2: #{tpu_custom_call.1} parent=1 // pred_check
      _
    $region3: #{tpu_custom_call.1} parent=1 // pred_check_branch
      %14 = sbr.rel (0) target = $region5
    $region4: #{tpu_custom_call.1} parent=1 // pred_region
      %16 = vsyncadd [#allocation5], 0
      %s18 = sshll.u32 %s1, 4
      %s19 = int_to_ptr.hbm [resolvable:$true] %s18
      %s20 = sshll.u32 [#allocation4], 4
      %s21 = int_to_ptr.vmem [resolvable:$true] %s20
      %23 = dma.hbm_to_vmem [thread:$0]  %s19, 128, %s21, [#allocation5]
    $region5: #{tpu_custom_call.1} parent=1 // pred_fallthru
      _
    // Predicated region
    $region6: #{tpu_custom_call.1} parent=1 // pred_check
      _
    $region7: #{tpu_custom_call.1} parent=1 // pred_check_branch
      %25 = sbr.rel (0) target = $region9
    $region8: #{tpu_custom_call.1} parent=1 // pred_region
      %27 = vsyncadd [#allocation8], 0
      %s28 = sshll.u32 %s2, 4
      %s29 = int_to_ptr.hbm [resolvable:$true] %s28
      %s30 = sshll.u32 [#allocation7], 4
      %s31 = int_to_ptr.vmem [resolvable:$true] %s30
      %36 = dma.hbm_to_vmem [thread:$0]  %s29, 256, %s31, [#allocation8], 64, 64, 4
    $region9: #{tpu_custom_call.1} parent=1 // pred_fallthru
      _
    // Predicated region
    $region10: #{tpu_custom_call.1} parent=1 // pred_check
      _
    $region11: #{tpu_custom_call.1} parent=1 // pred_check_branch
      %38 = sbr.rel (0) target = $region13
    $region12: #{tpu_custom_call.1} parent=1 // pred_region
      _
    $region13: #{tpu_custom_call.1} parent=1 // pred_fallthru
      _
    // Predicated region
    $region14: #{tpu_custom_call.1} parent=1 // pred_check
      _
    $region15: #{tpu_custom_call.1} parent=1 // pred_check_branch
      %40 = sbr.rel (0) target = $region17
    $region16: #{tpu_custom_call.1} parent=1 // pred_region
      %42 = dma.done [#allocation5], 128
    $region17: #{tpu_custom_call.1} parent=1 // pred_fallthru
      _
    // Predicated region
    $region18: #{tpu_custom_call.1} parent=1 // pred_check
      _
    $region19: #{tpu_custom_call.1} parent=1 // pred_check_branch
      %44 = sbr.rel (0) target = $region21
    $region20: #{tpu_custom_call.1} parent=1 // pred_region
      %46 = dma.done [#allocation8], 256
    $region21: #{tpu_custom_call.1} parent=1 // pred_fallthru
      _
    %v48 = vld [vmem:[#allocation4] sm:$0xff]
    %v49 = vpack.c.bf16 %v48, %v48
    %v50 = vld [vmem:[#allocation7] sm:$0xf]
    %v51 = vld [vmem:[#allocation7 + $0x4] sm:$0xf]
    %v52 = vld [vmem:[#allocation7 + $0x8] sm:$0xf]
    %v53 = vld [vmem:[#allocation7 + $0xc] sm:$0xf]
    %v58 = vunpack.c.l.b16 %v50
    %v59 = vunpack.c.l.b16 %v51
    %v60 = vunpack.c.l.b16 %v52
    %v61 = vunpack.c.l.b16 %v53
    %v62 = vpack.c.b16 %v59, %v58
    %v63 = vpack.c.b16 %v61, %v60
    %vm66 = vcmask 261120
    %v68 = vsel %vm66, %v49, 0
    %70 = vmatpush.bf16.msra.mxu0 0
    %71 = vmatpush.bf16.msra.mxu0 0
    %72 = vmatpush.bf16.msra.mxu0 0
    %73 = vmatpush.bf16.msra.mxu0 0
    %74 = vmatpush.bf16.msra.mxu0 0
    %75 = vmatpush.bf16.msra.mxu0 0
    %76 = vmatpush.bf16.msra.mxu0 %v63
    %77 = vmatpush.bf16.msra.mxu0 %v62
    %78 = vmatmul.bf16.gmra.mxu0 %v68
    %v79 = vpop.f32.mrf.mxu0
    %v80 = vadd.f32 0.0, %v79
    %v81 = vpop.f32.mrf.mxu0
    %82 = vdwg.mxu0
    %s83 = sld [smem:[#allocation3]]
    %v84 = vstv %s83
    %v85 = vmul.f32 %v80, %v84
    %v86 = vld [vmem:[%s3] sm:$0x1]
    %v88 = vperm.slane %v86, 0
    %v90 = vadd.f32 %v85, %v88
    %vm91 = vcmask 523264
    %92 = vst.msk [vmem:[#allocation9] sm:$0xff] %vm91, %v90
    // Predicated region
    $region22: #{tpu_custom_call.1} parent=1 // pred_check
      _
    $region23: #{tpu_custom_call.1} parent=1 // pred_check_branch
      %94 = sbr.rel (0) target = $region25
    $region24: #{tpu_custom_call.1} parent=1 // pred_region
      %96 = vsyncadd [#allocation6], 0
      %s98 = sshll.u32 [#allocation9], 4
      %s99 = int_to_ptr.vmem [resolvable:$true] %s98
      %s100 = sshll.u32 %s4, 4
      %s101 = int_to_ptr.hbm [resolvable:$true] %s100
      %103 = dma.vmem_to_hbm [thread:$0]  %s99, 128, %s101, [#allocation6]
    $region25: #{tpu_custom_call.1} parent=1 // pred_fallthru
      _
    // Predicated region
    $region26: #{tpu_custom_call.1} parent=1 // pred_check
      _
    $region27: #{tpu_custom_call.1} parent=1 // pred_check_branch
      %105 = sbr.rel (0) target = $region29
    $region28: #{tpu_custom_call.1} parent=1 // pred_region
      %107 = dma.done [#allocation6], 128
    $region29: #{tpu_custom_call.1} parent=1 // pred_fallthru
      _
    %108 = vsyncpa [#allocation5], 1
    %109 = vsyncpa [#allocation8], 1
    %110 = vsyncpa [#allocation6], 1

</llo_original>
